<compile_context>
chip_gen: v5e
topology: v5e:2x2
jax: 0.10.0
libtpu: 0.0.40
codegen_flags: <defaults>
</compile_context>

<pallas_src>
import functools

import numpy as np

import jax
import jax.numpy as jnp
from jax import lax
from jax.experimental import pallas as pl
from jax.experimental.pallas import tpu as pltpu


# ---------------------------------------------------------------------------
# In-kernel helpers
# ---------------------------------------------------------------------------
def _shift_lanes(x, off, roll_jnp_like):
    """Return y with y[..., j] = x[..., (j + off) mod width]."""
    width = x.shape[-1]
    if off % width == 0:
        return x
    amt = (-off) % width if roll_jnp_like else off % width
    return pltpu.roll(x, amt, 1)


def _border_masks(cin, s_pad, H, W):
    """Per-lane (h, w) coordinates for the flattened spatial axis."""
    log2w = W.bit_length() - 1
    lane = lax.broadcasted_iota(jnp.int32, (cin, s_pad), 1)
    h_idx = lane >> log2w
    w_idx = lane & (W - 1)
    return h_idx, w_idx


def _masked_shift(a, dy, dx, H, W, h_idx, w_idx, roll_jnp_like):
    """Shifted activation a[:, (h+dy)*W + (w+dx)] with zeros outside the image."""
    shifted = _shift_lanes(a, dy * W + dx, roll_jnp_like)
    conds = []
    if dy == -1:
        conds.append(h_idx >= 1)
    if dy == 1:
        conds.append(h_idx <= H - 2)
    if dx == -1:
        conds.append(w_idx >= 1)
    if dx == 1:
        conds.append(w_idx <= W - 2)
    if conds:
        m = conds[0]
        for c in conds[1:]:
            m = jnp.logical_and(m, c)
        shifted = jnp.where(m, shifted, 0.0)
    return shifted


def _conv3x3_lane(a, w_ref, b_ref, *, H, W, roll_jnp_like):
    """3x3 same conv + bias + ReLU.  a: (Cin, S_pad) f32, w_ref: (9, Cout, Cin) bf16."""
    cin, s_pad = a.shape
    cout = w_ref.shape[1]
    h_idx, w_idx = _border_masks(cin, s_pad, H, W)
    acc = jnp.zeros((cout, s_pad), jnp.float32)
    for dy in (-1, 0, 1):
        for dx in (-1, 0, 1):
            k = (dy + 1) * 3 + (dx + 1)
            shifted = _masked_shift(a, dy, dx, H, W, h_idx, w_idx, roll_jnp_like)
            acc = acc + jnp.dot(w_ref[k], shifted.astype(jnp.bfloat16),
                                preferred_element_type=jnp.float32)
    acc = acc + b_ref[...]                       # (Cout, 1) broadcast over lanes
    return jnp.maximum(acc, 0.0)                 # f32 epilogue (v5e-safe)


def _conv3x3_lane_cout1(a, w_ref, b_ref, *, H, W, roll_jnp_like):
    """3x3 same conv with Cout=1 (final layer), pre-activation output (1, S_pad).

    Uses VPU broadcast-multiplies + one sublane reduction instead of an M=1
    MXU matmul; stays in f32.
    """
    cin, s_pad = a.shape
    h_idx, w_idx = _border_masks(cin, s_pad, H, W)
    acc = jnp.zeros((cin, s_pad), jnp.float32)
    for dy in (-1, 0, 1):
        for dx in (-1, 0, 1):
            k = (dy + 1) * 3 + (dx + 1)
            shifted = _masked_shift(a, dy, dx, H, W, h_idx, w_idx, roll_jnp_like)
            acc = acc + w_ref[k] * shifted       # (Cin, 1) * (Cin, S) broadcast
    return jnp.sum(acc, axis=0, keepdims=True) + b_ref[...]


def _maxpool_lane(a, p_ref, *, W, roll_jnp_like):
    """2x2 stride-2 max pool: pairwise maxes via lane rolls + 0/1 compaction matmul."""
    m = jnp.maximum(a, _shift_lanes(a, 1, roll_jnp_like))
    m = jnp.maximum(m, _shift_lanes(m, W, roll_jnp_like))
    return jnp.dot(m, p_ref[...], preferred_element_type=jnp.float32)


# ---------------------------------------------------------------------------
# Fused forward kernel (whole autoencoder for one image per grid step)
# ---------------------------------------------------------------------------
def _autoencoder_kernel(x9_ref, w1_ref, b1_ref, w2_ref, b2_ref, w3_ref, b3_ref,
                        w4_ref, b4_ref, w5_ref, b5_ref, p1_ref, p2_ref,
                        u1_ref, u2_ref, o_ref, *, roll_jnp_like):
    r = roll_jnp_like

    # encoder: Conv2d(1, 32) + ReLU  -- Cin=1, single (32, 9) @ (9, 256) dot
    x9 = x9_ref[0].astype(jnp.bfloat16)                                   # (9, 256)
    a = jnp.dot(w1_ref[...], x9, preferred_element_type=jnp.float32)
    a = jnp.maximum(a + b1_ref[...], 0.0)                                 # (32, 256)

    # MaxPool 16x16 -> 8x8
    a = _maxpool_lane(a, p1_ref, W=16, roll_jnp_like=r)                   # (32, 128)

    # Conv2d(32, 64) + ReLU  (8x8)
    a = _conv3x3_lane(a, w2_ref, b2_ref, H=8, W=8, roll_jnp_like=r)       # (64, 128)

    # MaxPool 8x8 -> 4x4
    a = _maxpool_lane(a, p2_ref, W=8, roll_jnp_like=r)                    # (64, 128)

    # decoder: ConvTranspose2d(64, 32) + ReLU  (== conv w/ flipped kernel, 4x4)
    a = _conv3x3_lane(a, w3_ref, b3_ref, H=4, W=4, roll_jnp_like=r)       # (32, 128)

    # UpsamplingNearest 4x4 -> 8x8 (0/1 replication matmul)
    a = jnp.dot(a, u1_ref[...], preferred_element_type=jnp.float32)       # (32, 128)

    # Conv2d(32, 32) + ReLU  (8x8)
    a = _conv3x3_lane(a, w4_ref, b4_ref, H=8, W=8, roll_jnp_like=r)       # (32, 128)

    # UpsamplingNearest 8x8 -> 16x16
    a = jnp.dot(a, u2_ref[...], preferred_element_type=jnp.float32)       # (32, 256)

    # Conv2d(32, 1) + Sigmoid  (16x16), lane-dense (1, 256) output
    z = _conv3x3_lane_cout1(a, w5_ref, b5_ref, H=16, W=16, roll_jnp_like=r)
    o_ref[0] = pl.reciprocal(1.0 + jnp.exp(-z), approx=True)


# ---------------------------------------------------------------------------
# Glue: constant selection matrices, weight relayout, pallas_call wrapper
# ---------------------------------------------------------------------------
def _pool_matrix(H, W, s_in, s_out):
    """0/1 matrix compacting lanes (2ho)*W + 2wo -> ho*(W//2) + wo."""
    Ho, Wo = H // 2, W // 2
    m = np.zeros((s_in, s_out), np.float32)
    for ho in range(Ho):
        for wo in range(Wo):
            m[(2 * ho) * W + 2 * wo, ho * Wo + wo] = 1.0
    return jnp.asarray(m)


def _upsample_matrix(H, W, s_in, s_out):
    """0/1 matrix replicating lane (h2//2)*W + (w2//2) -> h2*(2W) + w2."""
    H2, W2 = 2 * H, 2 * W
    m = np.zeros((s_in, s_out), np.float32)
    for h2 in range(H2):
        for w2 in range(W2):
            m[(h2 // 2) * W + (w2 // 2), h2 * W2 + w2] = 1.0
    return jnp.asarray(m)


def _to_k_oi(w_oihw):
    """(Cout, Cin, 3, 3) -> (9, Cout, Cin) with k = ky*3 + kx."""
    co, ci, kh, kw = w_oihw.shape
    return jnp.transpose(w_oihw, (2, 3, 0, 1)).reshape(kh * kw, co, ci)


def _full_spec(shape):
    rank = len(shape)
    return pl.BlockSpec(shape, lambda n, _r=rank: (0,) * _r)


def autoencoder_forward(x_nchw, params, *, roll_jnp_like=True):
    N = x_nchw.shape[0]
    H = W = 16
    S = H * W

    # --- glue: first-layer im2col on the tiny Cin=1 input (9 KiB per image) ---
    img = x_nchw[:, 0].astype(jnp.float32)                     # (N, 16, 16)
    pad = jnp.pad(img, ((0, 0), (1, 1), (1, 1)))
    x9 = jnp.stack([pad[:, 1 + dy:1 + dy + H, 1 + dx:1 + dx + W]
                    for dy in (-1, 0, 1) for dx in (-1, 0, 1)], axis=1)
    x9 = x9.reshape(N, 9, S)

    # --- weights to kernel layout (bf16 MXU operands, f32 bias/epilogue) ---
    w1m = params["w1"].reshape(32, 9).astype(jnp.bfloat16)                 # (32, 9)
    w2k = _to_k_oi(params["w2"]).astype(jnp.bfloat16)                      # (9, 64, 32)
    w3k = _to_k_oi(params["w3"]).astype(jnp.bfloat16)                      # (9, 32, 64)
    w4k = _to_k_oi(params["w4"]).astype(jnp.bfloat16)                      # (9, 32, 32)
    w5k = jnp.transpose(params["w5"], (2, 3, 1, 0)).reshape(9, 32, 1)      # f32
    w5k = w5k.astype(jnp.float32)
    b1 = params["b1"].reshape(32, 1).astype(jnp.float32)
    b2 = params["b2"].reshape(64, 1).astype(jnp.float32)
    b3 = params["b3"].reshape(32, 1).astype(jnp.float32)
    b4 = params["b4"].reshape(32, 1).astype(jnp.float32)
    b5 = params["b5"].reshape(1, 1).astype(jnp.float32)

    # --- pooling / upsampling selection constants (0/1, exact in f32) ---
    p1 = _pool_matrix(16, 16, 256, 128)
    p2 = _pool_matrix(8, 8, 128, 128)
    u1 = _upsample_matrix(4, 4, 128, 128)
    u2 = _upsample_matrix(8, 8, 128, 256)

    # --- advisory cost estimate for the XLA scheduler ---
    macs = (32 * 9 * 256 + 32 * 256 * 128 + 9 * 64 * 32 * 128 + 64 * 128 * 128
            + 9 * 32 * 64 * 128 + 32 * 128 * 128 + 9 * 32 * 32 * 128
            + 32 * 128 * 256 + 9 * 32 * 256)
    const_bytes = int((w1m.size + w2k.size + w3k.size + w4k.size) * 2
                      + (w5k.size + b1.size + b2.size + b3.size + b4.size + b5.size
                         + p1.size + p2.size + u1.size + u2.size) * 4)
    cost = pl.CostEstimate(flops=2 * macs * N,
                           transcendentals=2 * 256 * N,
                           bytes_accessed=int(x9.size * 4 + N * 256 * 4 + const_bytes))

    kernel = functools.partial(_autoencoder_kernel, roll_jnp_like=roll_jnp_like)
    out = pl.pallas_call(
        kernel,
        out_shape=jax.ShapeDtypeStruct((N, 1, S), jnp.float32),
        grid=(N,),
        in_specs=[
            pl.BlockSpec((1, 9, S), lambda n: (n, 0, 0)),   # per-image patches
            _full_spec((32, 9)), _full_spec((32, 1)),
            _full_spec((9, 64, 32)), _full_spec((64, 1)),
            _full_spec((9, 32, 64)), _full_spec((32, 1)),
            _full_spec((9, 32, 32)), _full_spec((32, 1)),
            _full_spec((9, 32, 1)), _full_spec((1, 1)),
            _full_spec((256, 128)), _full_spec((128, 128)),
            _full_spec((128, 128)), _full_spec((128, 256)),
        ],
        out_specs=pl.BlockSpec((1, 1, S), lambda n: (n, 0, 0)),
        compiler_params=pltpu.CompilerParams(dimension_semantics=("parallel",)),
        cost_estimate=cost,
    )(x9, w1m, b1, w2k, b2, w3k, b3, w4k, b4, w5k, b5, p1, p2, u1, u2)

    return out.reshape(N, 1, 16, 16)


# ---------------------------------------------------------------------------
# One-time probe of pltpu.roll's rotation direction (runs a trivial kernel)
# ---------------------------------------------------------------------------
def _roll_is_jnp_like():
    x = jnp.tile(jnp.arange(128, dtype=jnp.float32)[None, :], (8, 1))

    def kernel(x_ref, o_ref):
        o_ref[...] = pltpu.roll(x_ref[...], 1, 1)

    r = pl.pallas_call(kernel, out_shape=jax.ShapeDtypeStruct((8, 128), jnp.float32))(x)
    return bool(jax.device_get(r)[0, 0] == 127.0)


# ---------------------------------------------------------------------------
# Parameters (deterministic, synthetic; stored in regular-conv OIHW layout)
# ---------------------------------------------------------------------------
def init_params(key):
    ks = jax.random.split(key, 10)

    def u(k, shape, fan_in):
        b = 1.0 / (fan_in ** 0.5)
        return jax.random.uniform(k, shape, jnp.float32, -b, b)

    p = {}
    p["w1"] = u(ks[0], (32, 1, 3, 3), 1 * 9)       # Conv2d(1, 32)
    p["b1"] = u(ks[1], (32,), 1 * 9)
    p["w2"] = u(ks[2], (64, 32, 3, 3), 32 * 9)     # Conv2d(32, 64)
    p["b2"] = u(ks[3], (64,), 32 * 9)
    # ConvTranspose2d(64, 32, 3, padding=1): weight (in=64, out=32, 3, 3);
    # fan_in = out_ch * k * k = 288.  With stride 1 / padding 1 it equals a
    # regular conv with in/out channels swapped and the kernel flipped.
    wt = u(ks[4], (64, 32, 3, 3), 32 * 9)
    p["w3"] = jnp.flip(jnp.transpose(wt, (1, 0, 2, 3)), axis=(2, 3))   # (32, 64, 3, 3)
    p["b3"] = u(ks[5], (32,), 32 * 9)
    p["w4"] = u(ks[6], (32, 32, 3, 3), 32 * 9)     # Conv2d(32, 32)
    p["b4"] = u(ks[7], (32,), 32 * 9)
    p["w5"] = u(ks[8], (1, 32, 3, 3), 32 * 9)      # Conv2d(32, 1)
    p["b5"] = u(ks[9], (1,), 32 * 9)
    return p


# ---------------------------------------------------------------------------
# Pure-JAX reference (for a numerical sanity check)
# ---------------------------------------------------------------------------
def _reference_forward(x_nchw, params):
    dn = ("NCHW", "OIHW", "NCHW")

    def conv(x, w, b):
        y = lax.conv_general_dilated(x, w, (1, 1), ((1, 1), (1, 1)),
                                     dimension_numbers=dn)
        return y + b[None, :, None, None]

    def pool(x):
        return lax.reduce_window(x, -jnp.inf, lax.max,
                                 (1, 1, 2, 2), (1, 1, 2, 2), "VALID")

    def up(x):
        return jnp.repeat(jnp.repeat(x, 2, axis=2), 2, axis=3)

    x = jax.nn.relu(conv(x_nchw, params["w1"], params["b1"])); x = pool(x)
    x = jax.nn.relu(conv(x, params["w2"], params["b2"])); x = pool(x)
    x = jax.nn.relu(conv(x, params["w3"], params["b3"])); x = up(x)
    x = jax.nn.relu(conv(x, params["w4"], params["b4"])); x = up(x)
    return jax.nn.sigmoid(conv(x, params["w5"], params["b5"]))


if __name__ == "__main__":
    key = jax.random.PRNGKey(0)
    pkey, xkey = jax.random.split(key)
    params = init_params(pkey)

    # Input like the PyTorch module expects: NCHW with a single channel.
    x = jax.random.uniform(xkey, (2, 1, 16, 16), dtype=jnp.float32)

    roll_jnp_like = _roll_is_jnp_like()
    fwd = jax.jit(lambda xx, pp: autoencoder_forward(xx, pp,
                                                     roll_jnp_like=roll_jnp_like))
    out = jax.block_until_ready(fwd(x, params))
    assert out.shape == (2, 1, 16, 16), out.shape

    ref = _reference_forward(x, params)
    max_err = float(jnp.max(jnp.abs(out - ref)))
    assert max_err < 2e-2, f"mismatch vs reference: {max_err}"

    print("KERNEL_OK")
</pallas_src>

<mosaic_0001>
module attributes {stable_mosaic.version = 11 : i64} {
  func.func @kernel(%arg0: memref<8x128xf32, #tpu.memory_space<vmem>>, %arg1: memref<8x128xf32, #tpu.memory_space<vmem>>) attributes {dimension_semantics = [], scalar_prefetch = 0 : i64, scratch_operands = 0 : i64, tpu.core_type = #tpu.core_type<tc>} {
    %c0 = arith.constant 0 : index
    %c0_0 = arith.constant 0 : index
    %0 = vector.load %arg0[%c0, %c0_0] : memref<8x128xf32, #tpu.memory_space<vmem>>, vector<8x128xf32>
    %c1_i32 = arith.constant 1 : i32
    %1 = tpu.dynamic_rotate %0 by %c1_i32 dim 1 : vector<8x128xf32>, i32 -> vector<8x128xf32>
    %c0_1 = arith.constant 0 : index
    %c0_2 = arith.constant 0 : index
    %2 = vector.load %arg1[%c0_1, %c0_2] : memref<8x128xf32, #tpu.memory_space<vmem>>, vector<8x128xf32>
    tpu.vector_store %arg1[%c0_1, %c0_2], %1 {strides = array<i32>} : memref<8x128xf32, #tpu.memory_space<vmem>>, vector<8x128xf32>,
    return
  }
}

</mosaic_0001>

<llo_original>
// kernel: tpu_custom_call.1
$region0: #{tpu_custom_call.1}
  #allocation0 [shape = 'u32[]', space=smem, size = 0x4, offset = 0x4, fixed_abs, tag = 'smem constant byte address 0x4 - core index']
  #allocation1 [shape = 'u32[72,128]{1,0:T(1,128)}', space=vmem, size = 0x9000, scoped, tag = 'internal scratch']
  %s0 = inlined_call_operand.hbm [shape: f32[8,128], index: 0, kind: input, shape index: {}]
  %s1 = inlined_call_operand.hbm [shape: f32[8,128], index: 1, kind: output, shape index: {}]
  %s2 = sld [smem:[#allocation0]]
  $region18: #{tpu_custom_call.1} parent=0
    _
  %s4 = ssub.s32 1, %s2
  %s5 = scalar_select 0, %s4, %s2
  $region1: #{tpu_custom_call.1} parent=0
    #allocation2 [shape = 'u8[4096]{0}', space=vmem, size = 0x1000, scoped, tag = 'input window, operand 0, single buffered']
    #allocation3 [shape = 's32[1]{0}', space=sflag, size = 0x4, scoped, tag = 'scoped memory for tpu_custom_call.1']
    #allocation4 [shape = 's32[1]{0}', space=sflag, size = 0x4, scoped, tag = 'scoped memory for tpu_custom_call.1']
    #allocation5 [shape = 'u8[4096]{0}', space=vmem, size = 0x1000, scoped, tag = 'output window, operand 0, single buffered']
    %6 = vsyncpa [#allocation3], 0
    %7 = vsyncpa [#allocation4], 0
    // Predicated region
    $region2: #{tpu_custom_call.1} parent=1 // pred_check
      _
    $region3: #{tpu_custom_call.1} parent=1 // pred_check_branch
      %9 = sbr.rel (0) target = $region5
    $region4: #{tpu_custom_call.1} parent=1 // pred_region
      %11 = vsyncadd [#allocation3], 0
      %s13 = sshll.u32 %s0, 4
      %s14 = int_to_ptr.hbm [resolvable:$true] %s13
      %s15 = sshll.u32 [#allocation2], 4
      %s16 = int_to_ptr.vmem [resolvable:$true] %s15
      %18 = dma.hbm_to_vmem [thread:$0]  %s14, 128, %s16, [#allocation3]
    $region5: #{tpu_custom_call.1} parent=1 // pred_fallthru
      _
    // Predicated region
    $region6: #{tpu_custom_call.1} parent=1 // pred_check
      _
    $region7: #{tpu_custom_call.1} parent=1 // pred_check_branch
      %20 = sbr.rel (0) target = $region9
    $region8: #{tpu_custom_call.1} parent=1 // pred_region
      %22 = dma.done [#allocation3], 128
    $region9: #{tpu_custom_call.1} parent=1 // pred_fallthru
      _
    %v23 = vld [vmem:[#allocation2] sm:$0xff]
    %24 = vrot.lane.b32.xlu0 %v23, 1
    %v25 = vpop.permute.xlu0 %24
    %26 = vst [vmem:[#allocation5] sm:$0xff] %v25
    // Predicated region
    $region10: #{tpu_custom_call.1} parent=1 // pred_check
      _
    $region11: #{tpu_custom_call.1} parent=1 // pred_check_branch
      %28 = sbr.rel (0) target = $region13
    $region12: #{tpu_custom_call.1} parent=1 // pred_region
      %30 = vsyncadd [#allocation4], 0
      %s32 = sshll.u32 [#allocation5], 4
      %s33 = int_to_ptr.vmem [resolvable:$true] %s32
      %s34 = sshll.u32 %s1, 4
      %s35 = int_to_ptr.hbm [resolvable:$true] %s34
      %37 = dma.vmem_to_hbm [thread:$0]  %s33, 128, %s35, [#allocation4]
    $region13: #{tpu_custom_call.1} parent=1 // pred_fallthru
      _
    // Predicated region
    $region14: #{tpu_custom_call.1} parent=1 // pred_check
      _
    $region15: #{tpu_custom_call.1} parent=1 // pred_check_branch
      %39 = sbr.rel (0) target = $region17
    $region16: #{tpu_custom_call.1} parent=1 // pred_region
      %41 = dma.done [#allocation4], 128
    $region17: #{tpu_custom_call.1} parent=1 // pred_fallthru
      _
    %42 = vsyncpa [#allocation3], 1
    %43 = vsyncpa [#allocation4], 1

</llo_original>
